<compile_context>
chip_gen: v7x
topology: tpu7x:2x2x1
jax: 0.10.0
libtpu: 0.0.40
codegen_flags: <defaults>
</compile_context>

<pallas_src>
import math

import jax
import jax.numpy as jnp
from jax.experimental import pallas as pl
from jax.experimental.pallas import tpu as pltpu

# problem sizes (small, consistent with the module's forward)
N = 16    # number of stocks (rows of stock_latent)
H = 128   # hidden_dim (full 128-lane vreg width -> lane-dense matmul & output)


def _vmem():
    return pl.BlockSpec(memory_space=pltpu.MemorySpace.VMEM)


# --------------------------------------------------------------------------
# Fused attention kernel
# --------------------------------------------------------------------------
def attention_kernel(latent_ref, wkv_ref, bkv_ref, q_ref, ctx_ref):
    f32 = jnp.float32
    latent = latent_ref[...]                                           # (N, H)
    hid = latent.shape[1]

    # one lane-dense matmul producing [key | value]  (N, 2H)
    kv = jnp.dot(latent, wkv_ref[...], preferred_element_type=f32) + bkv_ref[...]
    keys = kv[:, :hid]                                                 # (N, H)
    vals = kv[:, hid:]                                                 # (N, H)

    # attention scores: query . key_i  — VPU multiply + lane reduce
    q = q_ref[...]                                                     # (1, H)
    scores = jnp.sum(keys * q, axis=-1, keepdims=True)                 # (N, 1)

    # scale by 1/sqrt(key.shape[0] + 1e-6)  (N is static -> Python constant)
    inv_scale = 1.0 / math.sqrt(latent.shape[0] + 1e-6)
    scores = scores * inv_scale

    # TODO(synk): Dropout(0.1) omitted (inference-mode identity).
    scores = jnp.maximum(scores, 0.0)                                  # ReLU

    # softmax over the stock axis (dim 0)
    m = jnp.max(scores, axis=0, keepdims=True)
    e = jnp.exp(scores - m)
    denom = jnp.sum(e, axis=0, keepdims=True)
    attn = e * pl.reciprocal(denom, approx=True)                       # (N, 1)

    # nan/inf guard from the reference (returns zeros if triggered)
    bad = jnp.logical_or(jnp.any(jnp.isnan(attn)), jnp.any(jnp.isinf(attn)))

    # context vector: attn^T @ value  — sublane reduce, no transpose / tiny MXU op
    ctx = jnp.sum(attn * vals, axis=0, keepdims=True)                  # (1, H)
    ctx_ref[...] = jnp.where(bad, jnp.zeros_like(ctx), ctx)


def attention_layer(stock_latent, params):
    """Pallas equivalent of AttentionLayer.forward -> (hidden_dim,)."""
    # host-side weight packing (layout plumbing, not compute)
    w_cat = jnp.concatenate([params["w_key"], params["w_val"]], axis=1)   # (H, 2H)
    b_cat = jnp.concatenate([params["b_key"], params["b_val"]], axis=1)   # (1, 2H)
    q_row = params["query"].reshape(1, -1)                                # (1, H)

    args = (stock_latent, w_cat, b_cat, q_row)
    ctx = pl.pallas_call(
        attention_kernel,
        out_shape=jax.ShapeDtypeStruct((1, stock_latent.shape[1]), jnp.float32),
        in_specs=[_vmem() for _ in args],
        out_specs=_vmem(),
    )(*args)
    return ctx.reshape(stock_latent.shape[1])


# --------------------------------------------------------------------------
# Deterministic parameter init (weights already in x @ W layout)
# --------------------------------------------------------------------------
def init_params(key):
    kq, kkw, kkb, kvw, kvb = jax.random.split(key, 5)
    return {
        "query": (0.1 * jax.random.normal(kq, (H,))).astype(jnp.float32),
        "w_key": (0.1 * jax.random.normal(kkw, (H, H))).astype(jnp.float32),
        "b_key": (0.1 * jax.random.normal(kkb, (1, H))).astype(jnp.float32),
        "w_val": (0.1 * jax.random.normal(kvw, (H, H))).astype(jnp.float32),
        "b_val": (0.1 * jax.random.normal(kvb, (1, H))).astype(jnp.float32),
    }


if __name__ == "__main__":
    root = jax.random.PRNGKey(0)
    kx, kp = jax.random.split(root, 2)

    stock_latent = jax.random.normal(kx, (N, H), dtype=jnp.float32)
    params = init_params(kp)

    out = attention_layer(stock_latent, params)
    out = jax.block_until_ready(out)

    assert out.shape == (H,)
    assert jnp.isfinite(out).all()
    print("KERNEL_OK")
</pallas_src>

<mosaic_0001>
module attributes {stable_mosaic.version = 11 : i64} {
  func.func @attention_kernel(%arg0: memref<16x128xf32, #tpu.memory_space<vmem>>, %arg1: memref<128x256xf32, #tpu.memory_space<vmem>>, %arg2: memref<1x256xf32, #tpu.memory_space<vmem>>, %arg3: memref<1x128xf32, #tpu.memory_space<vmem>>, %arg4: memref<1x128xf32, #tpu.memory_space<vmem>>) attributes {dimension_semantics = [], scalar_prefetch = 0 : i64, scratch_operands = 0 : i64, tpu.core_type = #tpu.core_type<tc>} {
    %c0 = arith.constant 0 : index
    %c0_0 = arith.constant 0 : index
    %0 = vector.load %arg0[%c0, %c0_0] : memref<16x128xf32, #tpu.memory_space<vmem>>, vector<16x128xf32>
    %c0_1 = arith.constant 0 : index
    %c0_2 = arith.constant 0 : index
    %1 = vector.load %arg1[%c0_1, %c0_2] : memref<128x256xf32, #tpu.memory_space<vmem>>, vector<128x256xf32>
    %cst = arith.constant dense<0.000000e+00> : vector<16x256xf32>
    %2 = tpu.matmul %0, %1, %cst {dimension_numbers = #tpu.dot_dimension_numbers<[1], [0], [0], [1], [0, 0, 1, 1], [], []>} : vector<16x128xf32>, vector<128x256xf32>, vector<16x256xf32> -> vector<16x256xf32>
    %c0_3 = arith.constant 0 : index
    %c0_4 = arith.constant 0 : index
    %3 = vector.load %arg2[%c0_3, %c0_4] : memref<1x256xf32, #tpu.memory_space<vmem>>, vector<1x256xf32>
    %4 = vector.broadcast %3 : vector<1x256xf32> to vector<16x256xf32>
    %5 = arith.addf %2, %4 : vector<16x256xf32>
    %6 = vector.extract_strided_slice %5 {offsets = [0, 0], sizes = [16, 128], strides = [1, 1]} : vector<16x256xf32> to vector<16x128xf32>
    %7 = vector.extract_strided_slice %5 {offsets = [0, 128], sizes = [16, 128], strides = [1, 1]} : vector<16x256xf32> to vector<16x128xf32>
    %c0_5 = arith.constant 0 : index
    %c0_6 = arith.constant 0 : index
    %8 = vector.load %arg3[%c0_5, %c0_6] : memref<1x128xf32, #tpu.memory_space<vmem>>, vector<1x128xf32>
    %9 = vector.broadcast %8 : vector<1x128xf32> to vector<16x128xf32>
    %10 = arith.mulf %6, %9 : vector<16x128xf32>
    %cst_7 = arith.constant dense<0.000000e+00> : vector<16xf32>
    %11 = vector.multi_reduction <add>, %10, %cst_7 [1] : vector<16x128xf32> to vector<16xf32>
    %12 = vector.shape_cast %11 : vector<16xf32> to vector<16x1xf32>
    %cst_8 = arith.constant 0.249999985 : f32
    %13 = vector.broadcast %cst_8 : f32 to vector<16x1xf32>
    %14 = arith.mulf %12, %13 : vector<16x1xf32>
    %cst_9 = arith.constant 0.000000e+00 : f32
    %15 = vector.broadcast %cst_9 : f32 to vector<16x1xf32>
    %16 = arith.maximumf %14, %15 : vector<16x1xf32>
    %cst_10 = arith.constant dense<0xFF800000> : vector<1xf32>
    %17 = vector.multi_reduction <maximumf>, %16, %cst_10 [0] : vector<16x1xf32> to vector<1xf32>
    %18 = vector.shape_cast %17 : vector<1xf32> to vector<1x1xf32>
    %19 = vector.broadcast %18 : vector<1x1xf32> to vector<16x1xf32>
    %20 = arith.subf %16, %19 : vector<16x1xf32>
    %21 = math.exp %20 : vector<16x1xf32>
    %cst_11 = arith.constant dense<0.000000e+00> : vector<1xf32>
    %22 = vector.multi_reduction <add>, %21, %cst_11 [0] : vector<16x1xf32> to vector<1xf32>
    %23 = vector.shape_cast %22 : vector<1xf32> to vector<1x1xf32>
    %24 = tpu.reciprocal %23 {approx = true} : vector<1x1xf32> -> vector<1x1xf32>
    %25 = vector.broadcast %24 : vector<1x1xf32> to vector<16x1xf32>
    %26 = arith.mulf %21, %25 : vector<16x1xf32>
    %27 = arith.cmpf one, %26, %26 : vector<16x1xf32>
    %cst_12 = arith.constant 1.000000e+00 : f32
    %cst_13 = arith.constant 0.000000e+00 : f32
    %28 = vector.broadcast %cst_12 : f32 to vector<16x1xf32>
    %29 = vector.broadcast %cst_13 : f32 to vector<16x1xf32>
    %30 = arith.select %27, %28, %29 : vector<16x1xi1>, vector<16x1xf32>
    %31 = vector.shape_cast %30 : vector<16x1xf32> to vector<1x16x1xf32>
    %cst_14 = arith.constant dense<0xFF800000> : vector<1xf32>
    %32 = vector.multi_reduction <maximumf>, %31, %cst_14 [1, 2] : vector<1x16x1xf32> to vector<1xf32>
    %33 = vector.shape_cast %32 : vector<1xf32> to vector<1x1x1xf32>
    %34 = vector.extract %33[0, 0, 0] : f32 from vector<1x1x1xf32>
    %cst_15 = arith.constant 0.000000e+00 : f32
    %35 = arith.cmpf ogt, %34, %cst_15 : f32
    %36 = math.absf %26 : vector<16x1xf32>
    %cst_16 = arith.constant 0x7F800000 : f32
    %37 = vector.broadcast %cst_16 : f32 to vector<16x1xf32>
    %38 = arith.cmpf oeq, %36, %37 : vector<16x1xf32>
    %cst_17 = arith.constant 1.000000e+00 : f32
    %cst_18 = arith.constant 0.000000e+00 : f32
    %39 = vector.broadcast %cst_17 : f32 to vector<16x1xf32>
    %40 = vector.broadcast %cst_18 : f32 to vector<16x1xf32>
    %41 = arith.select %38, %39, %40 : vector<16x1xi1>, vector<16x1xf32>
    %42 = vector.shape_cast %41 : vector<16x1xf32> to vector<1x16x1xf32>
    %cst_19 = arith.constant dense<0xFF800000> : vector<1xf32>
    %43 = vector.multi_reduction <maximumf>, %42, %cst_19 [1, 2] : vector<1x16x1xf32> to vector<1xf32>
    %44 = vector.shape_cast %43 : vector<1xf32> to vector<1x1x1xf32>
    %45 = vector.extract %44[0, 0, 0] : f32 from vector<1x1x1xf32>
    %cst_20 = arith.constant 0.000000e+00 : f32
    %46 = arith.cmpf ogt, %45, %cst_20 : f32
    %47 = arith.ori %35, %46 : i1
    %48 = vector.broadcast %26 : vector<16x1xf32> to vector<16x128xf32>
    %49 = arith.mulf %48, %7 : vector<16x128xf32>
    %cst_21 = arith.constant dense<0.000000e+00> : vector<128xf32>
    %50 = vector.multi_reduction <add>, %49, %cst_21 [0] : vector<16x128xf32> to vector<128xf32>
    %51 = vector.shape_cast %50 : vector<128xf32> to vector<1x128xf32>
    %cst_22 = arith.constant 0.000000e+00 : f32
    %52 = vector.broadcast %cst_22 : f32 to vector<1x128xf32>
    %53 = arith.select %47, %52, %51 : vector<1x128xf32>
    %c0_23 = arith.constant 0 : index
    %c0_24 = arith.constant 0 : index
    %54 = vector.load %arg4[%c0_23, %c0_24] : memref<1x128xf32, #tpu.memory_space<vmem>>, vector<1x128xf32>
    tpu.vector_store %arg4[%c0_23, %c0_24], %53 {strides = array<i32>} : memref<1x128xf32, #tpu.memory_space<vmem>>, vector<1x128xf32>,
    return
  }
}

</mosaic_0001>

<llo_original>
// kernel: tpu_custom_call.1
$region0: #{tpu_custom_call.1}
  #allocation0 [shape = 'u32[]', space=smem, size = 0x4, offset = 0x4, fixed_abs, tag = 'smem constant byte address 0x4 - core index']
  #allocation1 [shape = 'u32[144,128]{1,0:T(1,128)}', space=vmem, size = 0x12000, scoped, tag = 'internal scratch']
  %s0 = inlined_call_operand.hbm [shape: f32[16,128], index: 0, kind: input, shape index: {}]
  %s1 = inlined_call_operand.hbm [shape: f32[128,256], index: 1, kind: input, shape index: {}]
  %s2 = inlined_call_operand.vmem [shape: f32[1,256], index: 2, kind: input, shape index: {}]
  %s3 = inlined_call_operand.vmem [shape: f32[1,128], index: 3, kind: input, shape index: {}]
  %s4 = inlined_call_operand.hbm [shape: f32[1,128], index: 4, kind: output, shape index: {}]
  %s5 = sld [smem:[#allocation0]]
  $region34: #{tpu_custom_call.1} parent=0
    _
  %s7 = ssub.s32 1, %s5
  %s8 = scalar_select 0, %s7, %s5
  $region1: #{tpu_custom_call.1} parent=0
    #allocation2 [shape = 'u8[8192]{0}', space=vmem, size = 0x2000, scoped, tag = 'input window, operand 0, single buffered']
    #allocation3 [shape = 's32[1]{0}', space=sflag, size = 0x4, scoped, tag = 'scoped memory for tpu_custom_call.1']
    #allocation4 [shape = 's32[1]{0}', space=sflag, size = 0x4, scoped, tag = 'scoped memory for tpu_custom_call.1']
    #allocation5 [shape = 'u8[131072]{0}', space=vmem, size = 0x20000, scoped, tag = 'input window, operand 1, single buffered']
    #allocation6 [shape = 's32[1]{0}', space=sflag, size = 0x4, scoped, tag = 'scoped memory for tpu_custom_call.1']
    #allocation7 [shape = 'u8[512]{0}', space=vmem, size = 0x400, scoped, tag = 'output window, operand 0, single buffered']
    %9 = vsyncpa [#allocation3], 0
    %10 = vsyncpa [#allocation6], 0
    %11 = vsyncpa [#allocation4], 0
    // Predicated region
    $region2: #{tpu_custom_call.1} parent=1 // pred_check
      _
    $region3: #{tpu_custom_call.1} parent=1 // pred_check_branch
      %13 = sbr.rel (0) target = $region5
    $region4: #{tpu_custom_call.1} parent=1 // pred_region
      %s15 = ssub.s32 256, 256
      %16 = vsyncadd [#allocation3], %s15
      %s17 = sshll.u32 [#allocation2], 4
      %s18 = int_to_ptr.vmem [resolvable:$true] %s17
      %23 = dma.hbm_to_vmem [thread:$0]  %s0, 256, %s18, [#allocation3], 128, 128, 8
    $region5: #{tpu_custom_call.1} parent=1 // pred_fallthru
      _
    // Predicated region
    $region6: #{tpu_custom_call.1} parent=1 // pred_check
      _
    $region7: #{tpu_custom_call.1} parent=1 // pred_check_branch
      %25 = sbr.rel (0) target = $region9
    $region8: #{tpu_custom_call.1} parent=1 // pred_region
      %s27 = ssub.s32 4096, 4096
      %28 = vsyncadd [#allocation6], %s27
      %s29 = sshll.u32 [#allocation5], 4
      %s30 = int_to_ptr.vmem [resolvable:$true] %s29
      %35 = dma.hbm_to_vmem [thread:$0]  %s1, 4096, %s30, [#allocation6], 256, 256, 16
    $region9: #{tpu_custom_call.1} parent=1 // pred_fallthru
      _
    // Predicated region
    $region10: #{tpu_custom_call.1} parent=1 // pred_check
      _
    $region11: #{tpu_custom_call.1} parent=1 // pred_check_branch
      %37 = sbr.rel (0) target = $region13
    $region12: #{tpu_custom_call.1} parent=1 // pred_region
      _
    $region13: #{tpu_custom_call.1} parent=1 // pred_fallthru
      _
    // Predicated region
    $region14: #{tpu_custom_call.1} parent=1 // pred_check
      _
    $region15: #{tpu_custom_call.1} parent=1 // pred_check_branch
      %39 = sbr.rel (0) target = $region17
    $region16: #{tpu_custom_call.1} parent=1 // pred_region
      _
    $region17: #{tpu_custom_call.1} parent=1 // pred_fallthru
      _
    // Predicated region
    $region18: #{tpu_custom_call.1} parent=1 // pred_check
      _
    $region19: #{tpu_custom_call.1} parent=1 // pred_check_branch
      %41 = sbr.rel (0) target = $region21
    $region20: #{tpu_custom_call.1} parent=1 // pred_region
      %42 = dma.done [#allocation3], 256
    $region21: #{tpu_custom_call.1} parent=1 // pred_fallthru
      _
    // Predicated region
    $region22: #{tpu_custom_call.1} parent=1 // pred_check
      _
    $region23: #{tpu_custom_call.1} parent=1 // pred_check_branch
      %44 = sbr.rel (0) target = $region25
    $region24: #{tpu_custom_call.1} parent=1 // pred_region
      %45 = dma.done [#allocation6], 4096
    $region25: #{tpu_custom_call.1} parent=1 // pred_fallthru
      _
    %v46 = vld [vmem:[#allocation2] sm:$0xff]
    %v47 = vld [vmem:[#allocation2 + $0x8] sm:$0xff]
    %v48 = vld [vmem:[#allocation5] sm:$0xff]
    %v49 = vld [vmem:[#allocation5 + $0x8] sm:$0xff]
    %v50 = vld [vmem:[#allocation5 + $0x10] sm:$0xff]
    %v51 = vld [vmem:[#allocation5 + $0x18] sm:$0xff]
    %v52 = vld [vmem:[#allocation5 + $0x20] sm:$0xff]
    %v53 = vld [vmem:[#allocation5 + $0x28] sm:$0xff]
    %v54 = vld [vmem:[#allocation5 + $0x30] sm:$0xff]
    %v55 = vld [vmem:[#allocation5 + $0x38] sm:$0xff]
    %v56 = vld [vmem:[#allocation5 + $0x40] sm:$0xff]
    %v57 = vld [vmem:[#allocation5 + $0x48] sm:$0xff]
    %v58 = vld [vmem:[#allocation5 + $0x50] sm:$0xff]
    %v59 = vld [vmem:[#allocation5 + $0x58] sm:$0xff]
    %v60 = vld [vmem:[#allocation5 + $0x60] sm:$0xff]
    %v61 = vld [vmem:[#allocation5 + $0x68] sm:$0xff]
    %v62 = vld [vmem:[#allocation5 + $0x70] sm:$0xff]
    %v63 = vld [vmem:[#allocation5 + $0x78] sm:$0xff]
    %v64 = vld [vmem:[#allocation5 + $0x80] sm:$0xff]
    %v65 = vld [vmem:[#allocation5 + $0x88] sm:$0xff]
    %v66 = vld [vmem:[#allocation5 + $0x90] sm:$0xff]
    %v67 = vld [vmem:[#allocation5 + $0x98] sm:$0xff]
    %v68 = vld [vmem:[#allocation5 + $0xa0] sm:$0xff]
    %v69 = vld [vmem:[#allocation5 + $0xa8] sm:$0xff]
    %v70 = vld [vmem:[#allocation5 + $0xb0] sm:$0xff]
    %v71 = vld [vmem:[#allocation5 + $0xb8] sm:$0xff]
    %v72 = vld [vmem:[#allocation5 + $0xc0] sm:$0xff]
    %v73 = vld [vmem:[#allocation5 + $0xc8] sm:$0xff]
    %v74 = vld [vmem:[#allocation5 + $0xd0] sm:$0xff]
    %v75 = vld [vmem:[#allocation5 + $0xd8] sm:$0xff]
    %v76 = vld [vmem:[#allocation5 + $0xe0] sm:$0xff]
    %v77 = vld [vmem:[#allocation5 + $0xe8] sm:$0xff]
    %v78 = vld [vmem:[#allocation5 + $0xf0] sm:$0xff]
    %v79 = vld [vmem:[#allocation5 + $0xf8] sm:$0xff]
    %v80 = vld [vmem:[%s2] sm:$0x3]
    %v82 = vlaneseq
    %v83 = vshrl.u32 %v82, 7
    %v84 = vsub.s32 0, %v83
    %v85 = vrot.slane %v80, %v84
    %v86 = vlaneseq
    %v87 = vshrl.u32 %v86, 7
    %v88 = vsub.s32 1, %v87
    %v89 = vrot.slane %v80, %v88
    %92 = vmatprep.subr.mxu0 %v49
    %93 = vmatpush1.msra.mxu0 %v48
    %94 = vmatprep.subr.mxu0 %v51
    %95 = vmatpush1.msra.mxu0 %v50
    %96 = vmatprep.subr.mxu0 %v53
    %97 = vmatpush1.msra.mxu0 %v52
    %98 = vmatprep.subr.mxu0 %v55
    %99 = vmatpush1.msra.mxu0 %v54
    %100 = vmatprep.subr.mxu0 %v57
    %101 = vmatpush1.msra.mxu0 %v56
    %102 = vmatprep.subr.mxu0 %v59
    %103 = vmatpush1.msra.mxu0 %v58
    %104 = vmatprep.subr.mxu0 %v61
    %105 = vmatpush1.msra.mxu0 %v60
    %106 = vmatprep.subr.mxu0 %v63
    %107 = vmatpush1.msra.mxu0 %v62
    %108 = vmatprep.subr.mxu0 %v65
    %109 = vmatpush1.msra.mxu0 %v64
    %110 = vmatprep.subr.mxu0 %v67
    %111 = vmatpush1.msra.mxu0 %v66
    %112 = vmatprep.subr.mxu0 %v69
    %113 = vmatpush1.msra.mxu0 %v68
    %114 = vmatprep.subr.mxu0 %v71
    %115 = vmatpush1.msra.mxu0 %v70
    %116 = vmatprep.subr.mxu0 %v73
    %117 = vmatpush1.msra.mxu0 %v72
    %118 = vmatprep.subr.mxu0 %v75
    %119 = vmatpush1.msra.mxu0 %v74
    %120 = vmatprep.subr.mxu0 %v77
    %121 = vmatpush1.msra.mxu0 %v76
    %122 = vmatprep.subr.mxu0 %v79
    %123 = vmatpush1.msra.mxu0 %v78
    %124 = vmatprep.subr.mxu0 0.0
    %125 = vmatpush1.msra.mxu0 0.0
    %126 = vmatprep.subr.mxu0 0.0
    %127 = vmatpush1.msra.mxu0 0.0
    %128 = vmatprep.subr.mxu0 0.0
    %129 = vmatpush1.msra.mxu0 0.0
    %130 = vmatprep.subr.mxu0 0.0
    %131 = vmatpush1.msra.mxu0 0.0
    %132 = vmatprep.subr.mxu0 0.0
    %133 = vmatpush1.msra.mxu0 0.0
    %134 = vmatprep.subr.mxu0 0.0
    %135 = vmatpush1.msra.mxu0 0.0
    %136 = vmatprep.subr.mxu0 0.0
    %137 = vmatpush1.msra.mxu0 0.0
    %138 = vmatprep.subr.mxu0 0.0
    %139 = vmatpush1.msra.mxu0 0.0
    %140 = vmatprep.subr.mxu0 0.0
    %141 = vmatpush1.msra.mxu0 0.0
    %142 = vmatprep.subr.mxu0 0.0
    %143 = vmatpush1.msra.mxu0 0.0
    %144 = vmatprep.subr.mxu0 0.0
    %145 = vmatpush1.msra.mxu0 0.0
    %146 = vmatprep.subr.mxu0 0.0
    %147 = vmatpush1.msra.mxu0 0.0
    %148 = vmatprep.subr.mxu0 0.0
    %149 = vmatpush1.msra.mxu0 0.0
    %150 = vmatprep.subr.mxu0 0.0
    %151 = vmatpush1.msra.mxu0 0.0
    %152 = vmatprep.subr.mxu0 0.0
    %153 = vmatpush1.msra.mxu0 0.0
    %154 = vmatprep.subr.mxu0 0.0
    %155 = vmatpush1.msra.mxu0 0.0
    %156 = vmatprep.mubr.f32.mxu0 0.0
    %157 = vmatmul.mubr.f32.gmra.mrb[0].mxu0 %v46
    %v158 = vpop.f32.mrb[0].mxu0
    %v159 = vadd.f32 %v85, %v158
    %v160 = vpop.f32.mrb[0].mxu0
    %v161 = vadd.f32 %v89, %v160
    %162 = vmatprep.mubr.f32.mxu0 0.0
    %163 = vmatmul.mubr.f32.gmra.mrb[0].mxu0 %v47
    %v164 = vpop.f32.mrb[0].mxu0
    %v165 = vadd.f32 %v85, %v164
    %v166 = vpop.f32.mrb[0].mxu0
    %v167 = vadd.f32 %v89, %v166
    %168 = vdwg.mxu0
    %v169 = vld [vmem:[%s3] sm:$0x1]
    %v171 = vlaneseq
    %v172 = vshrl.u32 %v171, 7
    %v173 = vsub.s32 0, %v172
    %v174 = vrot.slane %v169, %v173
    %v176 = vmul.f32 %v159, %v174
    %v177 = vmul.f32 %v165, %v174
    %178 = vadd.xlane.f32.xlu0 %v176
    %v179 = vpop.xlane.xlu0 %178
    %180 = vadd.xlane.f32.xlu0 %v177
    %v181 = vpop.xlane.xlu0 %180
    %v182 = vmul.f32 %v179, 0.24999999
    %v183 = vmul.f32 %v181, 0.24999999
    %v184 = vmax.f32 %v182, 0.0
    %v185 = vmax.f32 %v183, 0.0
    %v186 = vmax.f32 %v184, %v185
    %v187 = vrot.slane %v186, 4
    %v188 = vmax.f32 %v186, %v187
    %v189 = vrot.slane %v188, 2
    %v190 = vmax.f32 %v188, %v189
    %v191 = vrot.slane %v190, 1
    %v192 = vmax.f32 %v190, %v191
    %v193 = vsub.f32 %v184, %v192
    %v194 = vsub.f32 %v185, %v192
    %v195 = vmul.f32 %v193, 1.442695
    %v196 = vpow.pop %v195
    %v197 = vmul.f32 %v194, 1.442695
    %v198 = vpow.pop %v197
    %v199 = vadd.f32 %v196, %v198
    %v200 = vrot.slane %v199, 4
    %v201 = vadd.f32 %v199, %v200
    %v202 = vrot.slane %v201, 2
    %v203 = vadd.f32 %v201, %v202
    %v204 = vrot.slane %v203, 1
    %v205 = vadd.f32 %v203, %v204
    %v206 = vrcp.pop %v205
    %v207 = vmul.f32 %v196, %v206
    %v208 = vmul.f32 %v198, %v206
    %vm209 = vcmp.ne.f32.partialorder %v207, %v207
    %vm210 = vcmp.ne.f32.partialorder %v208, %v208
    %v211 = vsel %vm209, 1.0, 0.0
    %v212 = vsel %vm210, 1.0, 0.0
    %v213 = vmax.f32 %v211, %v212
    %v214 = vrot.slane %v213, 4
    %v215 = vmax.f32 %v213, %v214
    %v216 = vrot.slane %v215, 2
    %v217 = vmax.f32 %v215, %v216
    %v218 = vrot.slane %v217, 1
    %v219 = vmax.f32 %v217, %v218
    %s220 = vtos %v219
    %p221 = scmp.gt.f32.partialorder %s220, 0.0
    %v222 = vand.u32 2147483647, %v207
    %v223 = vand.u32 2147483647, %v208
    %vm224 = vcmp.eq.f32.partialorder %v222, inf
    %vm225 = vcmp.eq.f32.partialorder %v223, inf
    %v226 = vsel %vm224, 1.0, 0.0
    %v227 = vsel %vm225, 1.0, 0.0
    %v228 = vmax.f32 %v226, %v227
    %v229 = vrot.slane %v228, 4
    %v230 = vmax.f32 %v228, %v229
    %v231 = vrot.slane %v230, 2
    %v232 = vmax.f32 %v230, %v231
    %v233 = vrot.slane %v232, 1
    %v234 = vmax.f32 %v232, %v233
    %s235 = vtos %v234
    %p236 = scmp.gt.f32.partialorder %s235, 0.0
    %p237 = por %p221, %p236
    %v238 = vmul.f32 %v207, %v161
    %v239 = vmul.f32 %v208, %v167
    %v240 = vadd.f32 %v238, %v239
    %v241 = vrot.slane %v240, 4
    %v242 = vadd.f32 %v240, %v241
    %v243 = vrot.slane %v242, 2
    %v244 = vadd.f32 %v242, %v243
    %v245 = vrot.slane %v244, 1
    %v246 = vadd.f32 %v244, %v245
    %s247 = scalar_select %p237, 1, 0
    %v248 = vstv %s247
    %vm249 = vcmp.eq.s32.totalorder %v248, 1
    %v250 = vsel %vm249, 0.0, %v246
    %251 = vst [vmem:[#allocation7] sm:$0x1] %v250
    // Predicated region
    $region26: #{tpu_custom_call.1} parent=1 // pred_check
      _
    $region27: #{tpu_custom_call.1} parent=1 // pred_check_branch
      %253 = sbr.rel (0) target = $region29
    $region28: #{tpu_custom_call.1} parent=1 // pred_region
      %s255 = ssub.s32 16, 16
      %256 = vsyncadd [#allocation4], %s255
      %s258 = sshll.u32 [#allocation7], 4
      %s259 = int_to_ptr.vmem [resolvable:$true] %s258
      %261 = dma.vmem_to_hbm [thread:$0]  %s259, 16, %s4, [#allocation4]
    $region29: #{tpu_custom_call.1} parent=1 // pred_fallthru
      _
    // Predicated region
    $region30: #{tpu_custom_call.1} parent=1 // pred_check
      _
    $region31: #{tpu_custom_call.1} parent=1 // pred_check_branch
      %263 = sbr.rel (0) target = $region33
    $region32: #{tpu_custom_call.1} parent=1 // pred_region
      %264 = dma.done [#allocation4], 16
    $region33: #{tpu_custom_call.1} parent=1 // pred_fallthru
      _
    %265 = vsyncpa [#allocation3], 1
    %266 = vsyncpa [#allocation6], 1
    %267 = vsyncpa [#allocation4], 1

</llo_original>
